<compile_context>
chip_gen: v6e
topology: v6e:2x2x1
jax: 0.10.0
libtpu: 0.0.40
codegen_flags: <defaults>
</compile_context>

<pallas_src>
import jax
import jax.numpy as jnp
from jax.experimental import pallas as pl
from jax.experimental.pallas import tpu as pltpu

_LANE = 128


def _round_up(n, m):
    return ((n + m - 1) // m) * m


def _perceptron_kernel(x_ref, w_ref, b_ref, o_ref):
    # x_ref: (3, TILE) f32 in VMEM (batch on lanes)
    # w_ref: (3,) f32 in SMEM, b_ref: (1,) f32 in SMEM
    # o_ref: (1, TILE) f32 in VMEM
    w0 = w_ref[0]
    w1 = w_ref[1]
    w2 = w_ref[2]
    bb = b_ref[0]
    # 3 vmul + 3 vadd on the VPU, fully lane-dense.
    z = (w0 * x_ref[0:1, :]
         + w1 * x_ref[1:2, :]
         + w2 * x_ref[2:3, :]
         + bb)
    # sigmoid(z) = 1 / (1 + exp(-z)); exp and approx reciprocal both hit the EUP.
    o_ref[...] = pl.reciprocal(1.0 + jnp.exp(-z), approx=True).astype(o_ref.dtype)


def perceptron_forward(x, w, b, *, max_tile=8192):
    """x: (B, 3) f32, w: (3, 1) f32 (in, out), b: (1, 1) f32 -> (B, 1) f32."""
    B = x.shape[0]

    # Lane-dense batch tile: multiple of 128, capped so double-buffered
    # (in + out) blocks stay tiny relative to scoped VMEM.
    tile = min(max_tile, _round_up(B, _LANE))
    tile = _round_up(tile, _LANE)
    Bp = _round_up(B, tile)
    grid = (Bp // tile,)

    # Layout plumbing in the wrapper: batch -> lanes, pad to tile multiple.
    xt = jnp.pad(x.astype(jnp.float32).T, ((0, 0), (0, Bp - B)))   # (3, Bp)
    w_flat = jnp.asarray(w, jnp.float32).reshape(-1)               # (3,)
    b_flat = jnp.asarray(b, jnp.float32).reshape(-1)[:1]           # (1,)

    out_padded = pl.pallas_call(
        _perceptron_kernel,
        out_shape=jax.ShapeDtypeStruct((1, Bp), jnp.float32),
        grid=grid,
        in_specs=[
            pl.BlockSpec((3, tile), lambda i: (0, i)),             # x tiles (VMEM)
            pl.BlockSpec(memory_space=pltpu.SMEM),                 # w scalars
            pl.BlockSpec(memory_space=pltpu.SMEM),                 # b scalar
        ],
        out_specs=pl.BlockSpec((1, tile), lambda i: (0, i)),       # lane-dense out
        compiler_params=pltpu.CompilerParams(
            dimension_semantics=("parallel",),
        ),
    )(xt, w_flat, b_flat)

    # Back to the PyTorch-style (B, 1) shape.
    return out_padded[0, :B].reshape(B, 1)


def init_params(key):
    """Deterministic init mimicking torch.nn.Linear(3, 1) default init
    (uniform in [-1/sqrt(fan_in), 1/sqrt(fan_in)])."""
    k_w, k_b = jax.random.split(key)
    bound = 1.0 / jnp.sqrt(3.0)
    w = jax.random.uniform(k_w, (3, 1), jnp.float32, -bound, bound)   # (in, out)
    b = jax.random.uniform(k_b, (1, 1), jnp.float32, -bound, bound)
    return w, b


if __name__ == "__main__":
    key = jax.random.PRNGKey(0)
    k_x, k_p = jax.random.split(key)

    B = 8
    x = jax.random.normal(k_x, (B, 3), dtype=jnp.float32)
    w, b = init_params(k_p)

    out = perceptron_forward(x, w, b)
    jax.block_until_ready(out)

    # Pure-JAX reference check (tolerance loosened for approx EUP reciprocal).
    ref = jax.nn.sigmoid(x @ w + b)
    assert out.shape == (B, 1)
    assert jnp.allclose(out, ref, atol=1e-3, rtol=1e-3)

    print("KERNEL_OK")
</pallas_src>

<mosaic_0001>
module attributes {stable_mosaic.version = 11 : i64} {
  func.func @_perceptron_kernel(%arg0: i32, %arg1: memref<3x128xf32, #tpu.memory_space<vmem>>, %arg2: memref<3xf32, #tpu.memory_space<smem>>, %arg3: memref<1xf32, #tpu.memory_space<smem>>, %arg4: memref<1x128xf32, #tpu.memory_space<vmem>>) attributes {dimension_semantics = [#tpu.dimension_semantics<parallel>], iteration_bounds = array<i64: 1>, scalar_prefetch = 0 : i64, scratch_operands = 0 : i64, tpu.core_type = #tpu.core_type<tc>, window_params = [{transform_indices = @transform_0, window_bounds = array<i64: 3, 128>}, {transform_indices = @transform_1, window_bounds = array<i64: 3>}, {transform_indices = @transform_2, window_bounds = array<i64: 1>}, {transform_indices = @transform_3, window_bounds = array<i64: 1, 128>}]} {
    %c0 = arith.constant 0 : index
    %0 = memref.load %arg2[%c0] : memref<3xf32, #tpu.memory_space<smem>>
    %c1 = arith.constant 1 : index
    %1 = memref.load %arg2[%c1] : memref<3xf32, #tpu.memory_space<smem>>
    %c2 = arith.constant 2 : index
    %2 = memref.load %arg2[%c2] : memref<3xf32, #tpu.memory_space<smem>>
    %c0_0 = arith.constant 0 : index
    %3 = memref.load %arg3[%c0_0] : memref<1xf32, #tpu.memory_space<smem>>
    %c0_1 = arith.constant 0 : index
    %c0_2 = arith.constant 0 : index
    %4 = vector.load %arg1[%c0_1, %c0_2] : memref<3x128xf32, #tpu.memory_space<vmem>>, vector<1x128xf32>
    %5 = vector.broadcast %0 : f32 to vector<1x128xf32>
    %6 = arith.mulf %5, %4 : vector<1x128xf32>
    %c1_3 = arith.constant 1 : index
    %c0_4 = arith.constant 0 : index
    %7 = vector.load %arg1[%c1_3, %c0_4] : memref<3x128xf32, #tpu.memory_space<vmem>>, vector<1x128xf32>
    %8 = vector.broadcast %1 : f32 to vector<1x128xf32>
    %9 = arith.mulf %8, %7 : vector<1x128xf32>
    %10 = arith.addf %6, %9 : vector<1x128xf32>
    %c2_5 = arith.constant 2 : index
    %c0_6 = arith.constant 0 : index
    %11 = vector.load %arg1[%c2_5, %c0_6] : memref<3x128xf32, #tpu.memory_space<vmem>>, vector<1x128xf32>
    %12 = vector.broadcast %2 : f32 to vector<1x128xf32>
    %13 = arith.mulf %12, %11 : vector<1x128xf32>
    %14 = arith.addf %10, %13 : vector<1x128xf32>
    %15 = vector.broadcast %3 : f32 to vector<1x128xf32>
    %16 = arith.addf %14, %15 : vector<1x128xf32>
    %cst = arith.constant 0.000000e+00 : f32
    %17 = vector.broadcast %cst : f32 to vector<1x128xf32>
    %18 = arith.subf %17, %16 : vector<1x128xf32>
    %19 = math.exp %18 : vector<1x128xf32>
    %cst_7 = arith.constant 1.000000e+00 : f32
    %20 = vector.broadcast %cst_7 : f32 to vector<1x128xf32>
    %21 = arith.addf %20, %19 : vector<1x128xf32>
    %22 = tpu.reciprocal %21 {approx = true} : vector<1x128xf32> -> vector<1x128xf32>
    %c0_8 = arith.constant 0 : index
    %c0_9 = arith.constant 0 : index
    %23 = vector.load %arg4[%c0_8, %c0_9] : memref<1x128xf32, #tpu.memory_space<vmem>>, vector<1x128xf32>
    tpu.vector_store %arg4[%c0_8, %c0_9], %22 {strides = array<i32>} : memref<1x128xf32, #tpu.memory_space<vmem>>, vector<1x128xf32>,
    return
  }
  func.func @transform_0(%arg0: i32) -> (i32, i32) {
    %c0_i32 = arith.constant 0 : i32
    %c0_i32_0 = arith.constant 0 : i32
    return %c0_i32, %arg0 : i32, i32
  }
  func.func @transform_1(%arg0: i32) -> i32 {
    %c0_i32 = arith.constant 0 : i32
    %c0_i32_0 = arith.constant 0 : i32
    return %c0_i32 : i32
  }
  func.func @transform_2(%arg0: i32) -> i32 {
    %c0_i32 = arith.constant 0 : i32
    %c0_i32_0 = arith.constant 0 : i32
    return %c0_i32 : i32
  }
  func.func @transform_3(%arg0: i32) -> (i32, i32) {
    %c0_i32 = arith.constant 0 : i32
    %c0_i32_0 = arith.constant 0 : i32
    return %c0_i32, %arg0 : i32, i32
  }
}

</mosaic_0001>

<llo_original>
// kernel: tpu_custom_call.1
$region0: #{tpu_custom_call.1}
  #allocation0 [shape = 'u32[]', space=smem, size = 0x4, offset = 0x4, fixed_abs, tag = 'smem constant byte address 0x4 - core index']
  #allocation1 [shape = 'u32[144,128]{1,0:T(1,128)}', space=vmem, size = 0x12000, scoped, tag = 'internal scratch']
  #allocation2 [shape = 'f32[1]{0:T(128)S(6)}', space=smem, size = 0x200, scoped, tag = 'scoped memory for tpu_custom_call.1']
  %s0 = inlined_call_operand.hbm [shape: f32[3,128], index: 0, kind: input, shape index: {}]
  %s1 = inlined_call_operand.vmem [shape: f32[3], index: 1, kind: input, shape index: {}]
  %s2 = inlined_call_operand.<no memory space> [shape: f32[1], index: 2, kind: input, shape index: {}]
  %s3 = inlined_call_operand.hbm [shape: f32[1,128], index: 3, kind: output, shape index: {}]
  %s4 = sld [smem:[#allocation0]]
  $region30: #{tpu_custom_call.1} parent=0
    _
  %s6 = ssub.s32 1, %s4
  %s7 = scalar_select 0, %s6, %s4
  %8 = sst [smem:[#allocation2]] %s2
  $region1: #{tpu_custom_call.1} parent=0
    #allocation3 [shape = 'u8[2048]{0}', space=vmem, size = 0x800, scoped, tag = 'input window, operand 0, single buffered']
    #allocation4 [shape = 's32[1]{0}', space=sflag, size = 0x4, scoped, tag = 'scoped memory for tpu_custom_call.1']
    #allocation5 [shape = 's32[1]{0}', space=sflag, size = 0x4, scoped, tag = 'scoped memory for tpu_custom_call.1']
    #allocation6 [shape = 's32[1]{0}', space=sflag, size = 0x4, scoped, tag = 'scoped memory for tpu_custom_call.1']
    #allocation7 [shape = 'u8[512]{0}', space=smem, size = 0x200, scoped, tag = 'input window, operand 1, single buffered']
    #allocation8 [shape = 'u8[512]{0}', space=vmem, size = 0x400, scoped, tag = 'output window, operand 0, single buffered']
    %9 = vsyncpa [#allocation4], 0
    %10 = vsyncpa [#allocation6], 0
    %11 = vsyncpa [#allocation5], 0
    // Predicated region
    $region2: #{tpu_custom_call.1} parent=1 // pred_check
      _
    $region3: #{tpu_custom_call.1} parent=1 // pred_check_branch
      %13 = sbr.rel (0) target = $region5
    $region4: #{tpu_custom_call.1} parent=1 // pred_region
      %s15 = ssub.s32 64, 64
      %16 = vsyncadd [#allocation4], %s15
      %s18 = sshll.u32 [#allocation3], 4
      %s19 = int_to_ptr.vmem [resolvable:$true] %s18
      %21 = dma.hbm_to_vmem [thread:$0]  %s0, 64, %s19, [#allocation4]
    $region5: #{tpu_custom_call.1} parent=1 // pred_fallthru
      _
    // Predicated region
    $region6: #{tpu_custom_call.1} parent=1 // pred_check
      _
    $region7: #{tpu_custom_call.1} parent=1 // pred_check_branch
      %23 = sbr.rel (0) target = $region9
    $region8: #{tpu_custom_call.1} parent=1 // pred_region
      %s25 = ssub.s32 16, 16
      %26 = vsyncadd [#allocation6], %s25
      %s28 = sshll.u32 %s1, 4
      %s29 = int_to_ptr.vmem [resolvable:$true] %s28
      %31 = dma.vmem_to_smem %s29, 16, [#allocation7], [#allocation6]
    $region9: #{tpu_custom_call.1} parent=1 // pred_fallthru
      _
    // Predicated region
    $region10: #{tpu_custom_call.1} parent=1 // pred_check
      _
    $region11: #{tpu_custom_call.1} parent=1 // pred_check_branch
      %33 = sbr.rel (0) target = $region13
    $region12: #{tpu_custom_call.1} parent=1 // pred_region
      _
    $region13: #{tpu_custom_call.1} parent=1 // pred_fallthru
      _
    // Predicated region
    $region14: #{tpu_custom_call.1} parent=1 // pred_check
      _
    $region15: #{tpu_custom_call.1} parent=1 // pred_check_branch
      %35 = sbr.rel (0) target = $region17
    $region16: #{tpu_custom_call.1} parent=1 // pred_region
      %36 = dma.done [#allocation4], 64
    $region17: #{tpu_custom_call.1} parent=1 // pred_fallthru
      _
    // Predicated region
    $region18: #{tpu_custom_call.1} parent=1 // pred_check
      _
    $region19: #{tpu_custom_call.1} parent=1 // pred_check_branch
      %38 = sbr.rel (0) target = $region21
    $region20: #{tpu_custom_call.1} parent=1 // pred_region
      %39 = dma.done [#allocation6], 16
    $region21: #{tpu_custom_call.1} parent=1 // pred_fallthru
      _
    %40 = sfence
    %s41 = sld [smem:[#allocation7]]
    %s42 = sld [smem:[#allocation7 + $0x1]]
    %s43 = sld [smem:[#allocation7 + $0x2]]
    %s44 = sld [smem:[#allocation2]]
    %v45 = vld [vmem:[#allocation3] sm:$0x1]
    %v46 = vstv %s41
    %v47 = vmul.f32 %v46, %v45
    %v48 = vld [vmem:[#allocation3 + $0x1] sm:$0x1]
    %v49 = vstv %s42
    %v50 = vmul.f32 %v49, %v48
    %v51 = vadd.f32 %v47, %v50
    %v52 = vld [vmem:[#allocation3 + $0x2] sm:$0x1]
    %v53 = vstv %s43
    %v54 = vmul.f32 %v53, %v52
    %v55 = vadd.f32 %v51, %v54
    %v56 = vstv %s44
    %v57 = vadd.f32 %v55, %v56
    %v58 = vsub.f32 0.0, %v57
    %v59 = vmul.f32 %v58, 1.442695
    %v60 = vpow.pop %v59
    %v61 = vadd.f32 %v60, 1.0
    %v62 = vrcp.pop %v61
    %63 = vst [vmem:[#allocation8] sm:$0x1] %v62
    // Predicated region
    $region22: #{tpu_custom_call.1} parent=1 // pred_check
      _
    $region23: #{tpu_custom_call.1} parent=1 // pred_check_branch
      %65 = sbr.rel (0) target = $region25
    $region24: #{tpu_custom_call.1} parent=1 // pred_region
      %s67 = ssub.s32 16, 16
      %68 = vsyncadd [#allocation5], %s67
      %s70 = sshll.u32 [#allocation8], 4
      %s71 = int_to_ptr.vmem [resolvable:$true] %s70
      %73 = dma.vmem_to_hbm [thread:$0]  %s71, 16, %s3, [#allocation5]
    $region25: #{tpu_custom_call.1} parent=1 // pred_fallthru
      _
    // Predicated region
    $region26: #{tpu_custom_call.1} parent=1 // pred_check
      _
    $region27: #{tpu_custom_call.1} parent=1 // pred_check_branch
      %75 = sbr.rel (0) target = $region29
    $region28: #{tpu_custom_call.1} parent=1 // pred_region
      %76 = dma.done [#allocation5], 16
    $region29: #{tpu_custom_call.1} parent=1 // pred_fallthru
      _
    %77 = vsyncpa [#allocation4], 1
    %78 = vsyncpa [#allocation5], 1
    %79 = vsyncpa [#allocation6], 1

</llo_original>
